<compile_context>
chip_gen: v5e
topology: v5e:2x2
jax: 0.10.0
libtpu: 0.0.40
codegen_flags: <defaults>
</compile_context>

<pallas_src>
import functools

import jax
import jax.numpy as jnp
import numpy as np
from jax.experimental import pallas as pl
from jax.experimental.pallas import tpu as pltpu


_FEAT_BLOCK_TARGET = 4 << 20   # ~4 MiB per feature block (per pipeline buffer)
_MAX_TOKEN_TILE = 4096         # keeps the (K, tn) mask tile vreg/VMEM friendly
_MAX_BATCH_FOLD = 64           # bounds per-step batched-matmul size


def _masked_feat_sum_kernel(mask_ref, feat_ref, out_ref, den_ref, *acc_scratch,
                            eps, n_total, tn, acc_in_out):
    # mask_ref: (bb, K, tn)   feat_ref: (bb, tn, tD)   out_ref: (bb, K, tD)
    # den_ref:  (bb, K, 1) f32 scratch
    # acc_scratch: optionally one (bb, K, tD) f32 scratch (non-f32 outputs)
    ni = pl.program_id(2)
    acc_ref = out_ref if acc_in_out else acc_scratch[0]

    @pl.when(ni == 0)
    def _():
        acc_ref[...] = jnp.zeros_like(acc_ref)
        den_ref[...] = jnp.zeros_like(den_ref)

    m = mask_ref[...]            # (bb, K, tn)  slots on sublanes, tokens on lanes
    f = feat_ref[...]            # (bb, tn, tD) tokens on sublanes, features on lanes

    if n_total % tn != 0:
        # Static tail handling: zero out-of-range tokens (mask columns AND
        # feature rows) so padded garbage never reaches the accumulators.
        base = ni * tn
        tok_lane = jax.lax.broadcasted_iota(jnp.int32, (1, 1, tn), 2) + base
        tok_sub = jax.lax.broadcasted_iota(jnp.int32, (1, tn, 1), 1) + base
        m = jnp.where(tok_lane < n_total, m, jnp.zeros_like(m))
        f = jnp.where(tok_sub < n_total, f, jnp.zeros_like(f))

    # Batched MXU contraction over tokens, f32 accumulation across N tiles.
    contrib = jnp.einsum('bkn,bnd->bkd', m, f,
                         preferred_element_type=jnp.float32)
    acc_ref[...] += contrib.astype(acc_ref.dtype)

    # Per-slot normalizer: partial sums of mask over tokens; N*eps added once
    # at finalize (== (mask + eps).sum(-1) exactly, fewer VPU ops per tile).
    den_ref[...] += jnp.sum(m.astype(jnp.float32), axis=-1, keepdims=True)

    @pl.when(ni == pl.num_programs(2) - 1)
    def _():
        inv = 1.0 / (den_ref[...] + n_total * eps)          # (bb, K, 1), exact
        out_ref[...] = (acc_ref[...].astype(jnp.float32) * inv).astype(out_ref.dtype)


def _largest_divisor_leq(n, cap):
    cap = max(1, min(int(cap), int(n)))
    for d in range(cap, 0, -1):
        if n % d == 0:
            return d
    return 1


def _pick_feature_tile(D, itemsize, target):
    """Feature (lane) tile: full D unless even a minimal tn=128 block blows the budget."""
    if D % 128 != 0 or 128 * D * itemsize <= target:
        return D
    cap = max(128, (target // (128 * itemsize)) // 128 * 128)
    cap = min(cap, D)
    for t in range(cap, 127, -128):
        if D % t == 0:
            return t
    return cap  # rare: partial last D block (padded lanes are discarded on writeback)


def _pick_token_tile(N, row_bytes, target):
    """Token tile: whole axis if it fits the budget, else a multiple of 128
    (preferring a divisor of N; otherwise in-kernel tail masking handles it)."""
    if N <= 128 or N * row_bytes <= target:
        return N
    cap = max(128, (target // max(row_bytes, 1)) // 128 * 128)
    cap = min(cap, _MAX_TOKEN_TILE, (N // 128) * 128)
    for t in range(cap, max(128, cap - 1024) - 1, -128):
        if N % t == 0:
            return t
    return cap


def masked_feat_sum_synthesizer(slots, mask, features, *, detach_mask=True, eps=1e-8):
    """Pallas forward for MaskedFeatSumSynthesizer.

    `slots` is accepted (mirrors the PyTorch signature) but unused by the forward.
    """
    del slots  # unused in the reference forward
    if detach_mask:
        mask = jax.lax.stop_gradient(mask)  # .detach() semantics (forward no-op)

    B, K, N = mask.shape
    Bf, Nf, D = features.shape
    assert (B, N) == (Bf, Nf), "mask (B,K,N) and features (B,N,D) disagree"

    out_dtype = features.dtype
    acc_in_out = (jnp.dtype(out_dtype) == jnp.dtype(jnp.float32))
    feat_isz = features.dtype.itemsize
    mask_isz = mask.dtype.itemsize
    out_isz = jnp.dtype(out_dtype).itemsize

    # ---- tiling (VMEM-budget aware, generation-safe) -----------------------
    tD = _pick_feature_tile(D, feat_isz, _FEAT_BLOCK_TARGET)
    tn = _pick_token_tile(N, tD * feat_isz, _FEAT_BLOCK_TARGET)

    bb = 1
    if tn == N:
        # Small-N regime: fold batch elements per step to amortize the fixed
        # per-grid-step overhead (dominant cost at e.g. N=64, D=128).
        per_b = (N * tD * feat_isz + K * N * mask_isz
                 + K * tD * out_isz + (0 if acc_in_out else K * tD * 4))
        bb = _largest_divisor_leq(
            B, min(B, _MAX_BATCH_FOLD, max(1, _FEAT_BLOCK_TARGET // max(per_b, 1))))

    n_b = B // bb
    n_d = pl.cdiv(D, tD)
    n_n = pl.cdiv(N, tn)

    # v7x megacore: ensure >=2 parallel blocks when the problem is big enough
    # (splitting D keeps feature HBM reads partitioned; mask re-reads are tiny).
    if (n_b * n_d < 2 and tD == D and D % 256 == 0
            and bb * tn * (D // 2) * feat_isz >= (1 << 20)):
        tD = D // 2
        n_d = 2

    # ---- VMEM budget / compiler params -------------------------------------
    feat_blk = bb * tn * tD * feat_isz
    mask_blk = bb * K * tn * mask_isz
    out_blk = bb * K * tD * out_isz
    acc_bytes = 0 if acc_in_out else bb * K * tD * 4
    den_bytes = bb * K * 128 * 4
    vmem_needed = 2 * (feat_blk + mask_blk) + 2 * out_blk + acc_bytes + den_bytes
    # Explicit scoped-VMEM limit; capped so it also fits v7x's 64 MiB physical VMEM.
    vmem_limit = int(min(max(2 * vmem_needed, 32 << 20), 56 << 20))

    scratch_shapes = [pltpu.VMEM((bb, K, 1), jnp.float32)]       # mask-sum accumulator
    if not acc_in_out:
        scratch_shapes.append(pltpu.VMEM((bb, K, tD), jnp.float32))  # weighted-feat acc

    kernel = functools.partial(
        _masked_feat_sum_kernel,
        eps=float(eps), n_total=N, tn=tn, acc_in_out=acc_in_out)

    cost = pl.CostEstimate(
        flops=2 * B * K * N * D,
        transcendentals=0,
        bytes_accessed=(features.size * feat_isz
                        + mask.size * mask_isz * int(n_d)
                        + B * K * D * out_isz),
    )

    out = pl.pallas_call(
        kernel,
        out_shape=jax.ShapeDtypeStruct((B, K, D), out_dtype),
        grid_spec=pltpu.PrefetchScalarGridSpec(
            num_scalar_prefetch=0,
            grid=(n_b, n_d, n_n),
            in_specs=[
                pl.BlockSpec((bb, K, tn), lambda b, d, n: (b, 0, n)),    # mask
                pl.BlockSpec((bb, tn, tD), lambda b, d, n: (b, n, d)),   # features
            ],
            out_specs=pl.BlockSpec((bb, K, tD), lambda b, d, n: (b, 0, d)),
            scratch_shapes=scratch_shapes,
        ),
        compiler_params=pltpu.CompilerParams(
            dimension_semantics=("parallel", "parallel", "arbitrary"),
            vmem_limit_bytes=vmem_limit),
        cost_estimate=cost,
    )(mask, features)
    return out


def reference_forward(mask, features, eps=1e-8):
    """Pure-JAX reference mirroring the PyTorch forward."""
    mf = jnp.einsum('bnd,bkn->bkd', features, mask)
    return mf / (mask + eps).sum(axis=-1, keepdims=True)


if __name__ == "__main__":
    # Small shapes consistent with the module (slot-attention style):
    B, K = 2, 8          # batch, num slots
    N = 64               # tokens (8x8 feature map)
    D = 128              # feature dim

    key = jax.random.PRNGKey(0)
    k_slots, k_mask, k_feat = jax.random.split(key, 3)

    slots = jax.random.normal(k_slots, (B, K, D), dtype=jnp.float32)   # unused in forward
    mask = jax.nn.softmax(
        jax.random.normal(k_mask, (B, K, N), dtype=jnp.float32), axis=1)
    features = jax.random.normal(k_feat, (B, N, D), dtype=jnp.float32)

    # f32 path (accumulates directly in the resident output block).
    out = jax.block_until_ready(masked_feat_sum_synthesizer(slots, mask, features))
    ref = reference_forward(mask, features)
    np.testing.assert_allclose(np.asarray(out), np.asarray(ref), rtol=2e-3, atol=2e-3)
    assert out.shape == (B, K, D)

    # bf16 streaming path (halves HBM traffic; f32 scratch accumulator path).
    mask_bf = mask.astype(jnp.bfloat16)
    feat_bf = features.astype(jnp.bfloat16)
    out_bf = jax.block_until_ready(
        masked_feat_sum_synthesizer(slots, mask_bf, feat_bf))
    ref_bf = reference_forward(mask_bf.astype(jnp.float32), feat_bf.astype(jnp.float32))
    np.testing.assert_allclose(np.asarray(out_bf, dtype=np.float32),
                               np.asarray(ref_bf), rtol=5e-2, atol=5e-2)
    assert out_bf.shape == (B, K, D)

    print("KERNEL_OK")
</pallas_src>

<mosaic_0001>
module attributes {stable_mosaic.version = 11 : i64} {
  func.func @_masked_feat_sum_kernel(%arg0: i32, %arg1: i32, %arg2: i32, %arg3: memref<2x8x64xf32, #tpu.memory_space<vmem>>, %arg4: memref<2x64x128xf32, #tpu.memory_space<vmem>>, %arg5: memref<2x8x128xf32, #tpu.memory_space<vmem>>, %arg6: memref<2x8x1xf32, #tpu.memory_space<vmem>>) attributes {dimension_semantics = [#tpu.dimension_semantics<parallel>, #tpu.dimension_semantics<parallel>, #tpu.dimension_semantics<arbitrary>], iteration_bounds = array<i64: 1, 1, 1>, scalar_prefetch = 0 : i64, scratch_operands = 1 : i64, tpu.core_type = #tpu.core_type<tc>, window_params = [{transform_indices = @transform_0, window_bounds = array<i64: 2, 8, 64>}, {transform_indices = @transform_1, window_bounds = array<i64: 2, 64, 128>}, {transform_indices = @transform_2, window_bounds = array<i64: 2, 8, 128>}]} {
    %c0_i32 = arith.constant 0 : i32
    %0 = arith.cmpi eq, %arg2, %c0_i32 : i32
    %1 = arith.extui %0 : i1 to i32
    %c0_i32_0 = arith.constant 0 : i32
    %2 = arith.cmpi ne, %1, %c0_i32_0 : i32
    scf.if %2 {
      %cst_21 = arith.constant 0.000000e+00 : f32
      %17 = vector.broadcast %cst_21 : f32 to vector<2x8x128xf32>
      %c0_22 = arith.constant 0 : index
      %c0_23 = arith.constant 0 : index
      %c0_24 = arith.constant 0 : index
      %18 = vector.load %arg5[%c0_22, %c0_23, %c0_24] : memref<2x8x128xf32, #tpu.memory_space<vmem>>, vector<2x8x128xf32>
      tpu.vector_store %arg5[%c0_22, %c0_23, %c0_24], %17 {strides = array<i32>} : memref<2x8x128xf32, #tpu.memory_space<vmem>>, vector<2x8x128xf32>,
      %cst_25 = arith.constant 0.000000e+00 : f32
      %19 = vector.broadcast %cst_25 : f32 to vector<2x8x1xf32>
      %c0_26 = arith.constant 0 : index
      %c0_27 = arith.constant 0 : index
      %c0_28 = arith.constant 0 : index
      %20 = vector.load %arg6[%c0_26, %c0_27, %c0_28] : memref<2x8x1xf32, #tpu.memory_space<vmem>>, vector<2x8x1xf32>
      tpu.vector_store %arg6[%c0_26, %c0_27, %c0_28], %19 {strides = array<i32>} : memref<2x8x1xf32, #tpu.memory_space<vmem>>, vector<2x8x1xf32>,
    } else {
    }
    %c0 = arith.constant 0 : index
    %c0_1 = arith.constant 0 : index
    %c0_2 = arith.constant 0 : index
    %3 = vector.load %arg3[%c0, %c0_1, %c0_2] : memref<2x8x64xf32, #tpu.memory_space<vmem>>, vector<2x8x64xf32>
    %c0_3 = arith.constant 0 : index
    %c0_4 = arith.constant 0 : index
    %c0_5 = arith.constant 0 : index
    %4 = vector.load %arg4[%c0_3, %c0_4, %c0_5] : memref<2x64x128xf32, #tpu.memory_space<vmem>>, vector<2x64x128xf32>
    "tpu.trace_start"() <{level = 10 : i32, message = "bkn,bnd->bkd"}> : () -> ()
    %cst = arith.constant dense<0.000000e+00> : vector<2x8x128xf32>
    %5 = tpu.matmul %3, %4, %cst {dimension_numbers = #tpu.dot_dimension_numbers<[2], [1], [1], [2], [0, 0, 0, 1, 1, 2], [0], [0]>} : vector<2x8x64xf32>, vector<2x64x128xf32>, vector<2x8x128xf32> -> vector<2x8x128xf32>
    "tpu.trace_stop"() : () -> ()
    %c0_6 = arith.constant 0 : index
    %c0_7 = arith.constant 0 : index
    %c0_8 = arith.constant 0 : index
    %6 = vector.load %arg5[%c0_6, %c0_7, %c0_8] : memref<2x8x128xf32, #tpu.memory_space<vmem>>, vector<2x8x128xf32>
    %7 = arith.addf %6, %5 : vector<2x8x128xf32>
    %c0_9 = arith.constant 0 : index
    %c0_10 = arith.constant 0 : index
    %c0_11 = arith.constant 0 : index
    %8 = vector.load %arg5[%c0_9, %c0_10, %c0_11] : memref<2x8x128xf32, #tpu.memory_space<vmem>>, vector<2x8x128xf32>
    tpu.vector_store %arg5[%c0_9, %c0_10, %c0_11], %7 {strides = array<i32>} : memref<2x8x128xf32, #tpu.memory_space<vmem>>, vector<2x8x128xf32>,
    %c0_12 = arith.constant 0 : index
    %c0_13 = arith.constant 0 : index
    %c0_14 = arith.constant 0 : index
    %9 = vector.load %arg6[%c0_12, %c0_13, %c0_14] : memref<2x8x1xf32, #tpu.memory_space<vmem>>, vector<2x8x1xf32>
    %cst_15 = arith.constant dense<0.000000e+00> : vector<2x8xf32>
    %10 = vector.multi_reduction <add>, %3, %cst_15 [2] : vector<2x8x64xf32> to vector<2x8xf32>
    %11 = vector.shape_cast %10 : vector<2x8xf32> to vector<2x8x1xf32>
    %12 = arith.addf %9, %11 : vector<2x8x1xf32>
    %c0_16 = arith.constant 0 : index
    %c0_17 = arith.constant 0 : index
    %c0_18 = arith.constant 0 : index
    %13 = vector.load %arg6[%c0_16, %c0_17, %c0_18] : memref<2x8x1xf32, #tpu.memory_space<vmem>>, vector<2x8x1xf32>
    tpu.vector_store %arg6[%c0_16, %c0_17, %c0_18], %12 {strides = array<i32>} : memref<2x8x1xf32, #tpu.memory_space<vmem>>, vector<2x8x1xf32>,
    %c0_i32_19 = arith.constant 0 : i32
    %14 = arith.cmpi eq, %arg2, %c0_i32_19 : i32
    %15 = arith.extui %14 : i1 to i32
    %c0_i32_20 = arith.constant 0 : i32
    %16 = arith.cmpi ne, %15, %c0_i32_20 : i32
    scf.if %16 {
      %c0_21 = arith.constant 0 : index
      %c0_22 = arith.constant 0 : index
      %c0_23 = arith.constant 0 : index
      %17 = vector.load %arg6[%c0_21, %c0_22, %c0_23] : memref<2x8x1xf32, #tpu.memory_space<vmem>>, vector<2x8x1xf32>
      %cst_24 = arith.constant 6.400000e-07 : f32
      %18 = vector.broadcast %cst_24 : f32 to vector<2x8x1xf32>
      %19 = arith.addf %17, %18 : vector<2x8x1xf32>
      %cst_25 = arith.constant 1.000000e+00 : f32
      %20 = vector.broadcast %cst_25 : f32 to vector<2x8x1xf32>
      %21 = arith.divf %20, %19 : vector<2x8x1xf32>
      %c0_26 = arith.constant 0 : index
      %c0_27 = arith.constant 0 : index
      %c0_28 = arith.constant 0 : index
      %22 = vector.load %arg5[%c0_26, %c0_27, %c0_28] : memref<2x8x128xf32, #tpu.memory_space<vmem>>, vector<2x8x128xf32>
      %23 = vector.broadcast %21 : vector<2x8x1xf32> to vector<2x8x128xf32>
      %24 = arith.mulf %22, %23 : vector<2x8x128xf32>
      %c0_29 = arith.constant 0 : index
      %c0_30 = arith.constant 0 : index
      %c0_31 = arith.constant 0 : index
      %25 = vector.load %arg5[%c0_29, %c0_30, %c0_31] : memref<2x8x128xf32, #tpu.memory_space<vmem>>, vector<2x8x128xf32>
      tpu.vector_store %arg5[%c0_29, %c0_30, %c0_31], %24 {strides = array<i32>} : memref<2x8x128xf32, #tpu.memory_space<vmem>>, vector<2x8x128xf32>,
    } else {
    }
    return
  }
  func.func @transform_0(%arg0: i32, %arg1: i32, %arg2: i32) -> (i32, i32, i32) {
    %c0_i32 = arith.constant 0 : i32
    %c0_i32_0 = arith.constant 0 : i32
    return %arg0, %c0_i32, %arg2 : i32, i32, i32
  }
  func.func @transform_1(%arg0: i32, %arg1: i32, %arg2: i32) -> (i32, i32, i32) {
    %c0_i32 = arith.constant 0 : i32
    return %arg0, %arg2, %arg1 : i32, i32, i32
  }
  func.func @transform_2(%arg0: i32, %arg1: i32, %arg2: i32) -> (i32, i32, i32) {
    %c0_i32 = arith.constant 0 : i32
    %c0_i32_0 = arith.constant 0 : i32
    return %arg0, %c0_i32, %arg1 : i32, i32, i32
  }
}

</mosaic_0001>

<llo_original>
// kernel: tpu_custom_call.1
$region0: #{tpu_custom_call.1}
  #allocation0 [shape = 'u32[]', space=smem, size = 0x4, offset = 0x4, fixed_abs, tag = 'smem constant byte address 0x4 - core index']
  #allocation1 [shape = 'u32[72,128]{1,0:T(1,128)}', space=vmem, size = 0x9000, scoped, tag = 'internal scratch']
  #allocation2 [shape = 'f32[2,8,1]{2,1,0:T(8,128)}', space=vmem, size = 0x2000, scoped, tag = 'scratch operand']
  %s0 = inlined_call_operand.hbm [shape: f32[2,8,64], index: 0, kind: input, shape index: {}]
  %s1 = inlined_call_operand.hbm [shape: f32[2,64,128], index: 1, kind: input, shape index: {}]
  %s2 = inlined_call_operand.hbm [shape: f32[2,8,128], index: 2, kind: output, shape index: {}]
  %s3 = sld [smem:[#allocation0]]
  $region34: #{tpu_custom_call.1} parent=0
    _
  %s5 = ssub.s32 1, %s3
  %s6 = scalar_select 0, %s5, %s3
  $region1: #{tpu_custom_call.1} parent=0
    #allocation3 [shape = 'u8[8192]{0}', space=vmem, size = 0x2000, scoped, tag = 'input window, operand 0, single buffered']
    #allocation4 [shape = 's32[1]{0}', space=sflag, size = 0x4, scoped, tag = 'scoped memory for tpu_custom_call.1']
    #allocation5 [shape = 's32[1]{0}', space=sflag, size = 0x4, scoped, tag = 'scoped memory for tpu_custom_call.1']
    #allocation6 [shape = 'u8[65536]{0}', space=vmem, size = 0x10000, scoped, tag = 'input window, operand 1, single buffered']
    #allocation7 [shape = 's32[1]{0}', space=sflag, size = 0x4, scoped, tag = 'scoped memory for tpu_custom_call.1']
    #allocation8 [shape = 'u8[8192]{0}', space=vmem, size = 0x2000, scoped, tag = 'output window, operand 0, single buffered']
    %7 = vsyncpa [#allocation4], 0
    %8 = vsyncpa [#allocation7], 0
    %9 = vsyncpa [#allocation5], 0
    // Predicated region
    $region2: #{tpu_custom_call.1} parent=1 // pred_check
      _
    $region3: #{tpu_custom_call.1} parent=1 // pred_check_branch
      %11 = sbr.rel (0) target = $region5
    $region4: #{tpu_custom_call.1} parent=1 // pred_region
      %13 = vsyncadd [#allocation4], 0
      %s14 = sshll.u32 %s0, 4
      %s15 = int_to_ptr.hbm [resolvable:$true] %s14
      %s16 = sshll.u32 [#allocation3], 4
      %s17 = int_to_ptr.vmem [resolvable:$true] %s16
      %22 = dma.hbm_to_vmem [thread:$0]  %s15, 256, %s17, [#allocation4], 128, 128, 8
    $region5: #{tpu_custom_call.1} parent=1 // pred_fallthru
      _
    // Predicated region
    $region6: #{tpu_custom_call.1} parent=1 // pred_check
      _
    $region7: #{tpu_custom_call.1} parent=1 // pred_check_branch
      %24 = sbr.rel (0) target = $region9
    $region8: #{tpu_custom_call.1} parent=1 // pred_region
      %26 = vsyncadd [#allocation7], 0
      %s27 = sshll.u32 %s1, 4
      %s28 = int_to_ptr.hbm [resolvable:$true] %s27
      %s29 = sshll.u32 [#allocation6], 4
      %s30 = int_to_ptr.vmem [resolvable:$true] %s29
      %35 = dma.hbm_to_vmem [thread:$0]  %s28, 2048, %s30, [#allocation7], 128, 128, 8
    $region9: #{tpu_custom_call.1} parent=1 // pred_fallthru
      _
    // Predicated region
    $region10: #{tpu_custom_call.1} parent=1 // pred_check
      _
    $region11: #{tpu_custom_call.1} parent=1 // pred_check_branch
      %37 = sbr.rel (0) target = $region13
    $region12: #{tpu_custom_call.1} parent=1 // pred_region
      %39 = dma.done [#allocation4], 256
    $region13: #{tpu_custom_call.1} parent=1 // pred_fallthru
      _
    // Predicated region
    $region14: #{tpu_custom_call.1} parent=1 // pred_check
      _
    $region15: #{tpu_custom_call.1} parent=1 // pred_check_branch
      %41 = sbr.rel (0) target = $region17
    $region16: #{tpu_custom_call.1} parent=1 // pred_region
      %43 = dma.done [#allocation7], 2048
    $region17: #{tpu_custom_call.1} parent=1 // pred_fallthru
      _
    %p44 = scmp.eq.s32.totalorder 0, 0
    // Predicated region
    $region18: #{tpu_custom_call.1} parent=1 // pred_check
      %p45 = pneg %p44
    $region19: #{tpu_custom_call.1} parent=1 // pred_check_branch
      %47 = sbr.rel (%p45) target = $region21
    $region20: #{tpu_custom_call.1} parent=1 // pred_region
      %48 = vst [vmem:[#allocation8] sm:$0xff] 0.0
      %49 = vst [vmem:[#allocation8 + $0x8] sm:$0xff] 0.0
      %vm50 = vcmask 7168
      %51 = vst.msk [vmem:[#allocation2] sm:$0xff] %vm50, 0.0
      %52 = vst.msk [vmem:[#allocation2 + $0x8] sm:$0xff] %vm50, 0.0
    $region21: #{tpu_custom_call.1} parent=1 // pred_fallthru
      _
    %v53 = vld [vmem:[#allocation3] sm:$0xff]
    %v54 = vld [vmem:[#allocation3 + $0x8] sm:$0xff]
    %v55 = vld [vmem:[#allocation6] sm:$0xff]
    %v56 = vld [vmem:[#allocation6 + $0x8] sm:$0xff]
    %v57 = vld [vmem:[#allocation6 + $0x10] sm:$0xff]
    %v58 = vld [vmem:[#allocation6 + $0x18] sm:$0xff]
    %v59 = vld [vmem:[#allocation6 + $0x20] sm:$0xff]
    %v60 = vld [vmem:[#allocation6 + $0x28] sm:$0xff]
    %v61 = vld [vmem:[#allocation6 + $0x30] sm:$0xff]
    %v62 = vld [vmem:[#allocation6 + $0x38] sm:$0xff]
    %v63 = vld [vmem:[#allocation6 + $0x40] sm:$0xff]
    %v64 = vld [vmem:[#allocation6 + $0x48] sm:$0xff]
    %v65 = vld [vmem:[#allocation6 + $0x50] sm:$0xff]
    %v66 = vld [vmem:[#allocation6 + $0x58] sm:$0xff]
    %v67 = vld [vmem:[#allocation6 + $0x60] sm:$0xff]
    %v68 = vld [vmem:[#allocation6 + $0x68] sm:$0xff]
    %v69 = vld [vmem:[#allocation6 + $0x70] sm:$0xff]
    %v70 = vld [vmem:[#allocation6 + $0x78] sm:$0xff]
    %vm71 = vcmask 523264
    %v73 = vsel %vm71, %v53, 0
    %75 = vmatpush.msra.mxu0 0.0
    %76 = vmatpush.msra.mxu0 0.0
    %77 = vmatpush.msra.mxu0 0.0
    %78 = vmatpush.msra.mxu0 0.0
    %79 = vmatpush.msra.mxu0 0.0
    %80 = vmatpush.msra.mxu0 0.0
    %81 = vmatpush.msra.mxu0 0.0
    %82 = vmatpush.msra.mxu0 0.0
    %83 = vmatpush.msra.mxu0 %v62
    %84 = vmatpush.msra.mxu0 %v61
    %85 = vmatpush.msra.mxu0 %v60
    %86 = vmatpush.msra.mxu0 %v59
    %87 = vmatpush.msra.mxu0 %v58
    %88 = vmatpush.msra.mxu0 %v57
    %89 = vmatpush.msra.mxu0 %v56
    %90 = vmatpush.msra.mxu0 %v55
    %91 = vmatmul.f32.gmra.mxu0 %v73
    %v92 = vpop.f32.mrf.mxu0
    %v93 = vadd.f32 0.0, %v92
    %94 = vdwg.mxu0
    %v96 = vsel %vm71, %v54, 0
    %98 = vmatpush.msra.mxu0 0.0
    %99 = vmatpush.msra.mxu0 0.0
    %100 = vmatpush.msra.mxu0 0.0
    %101 = vmatpush.msra.mxu0 0.0
    %102 = vmatpush.msra.mxu0 0.0
    %103 = vmatpush.msra.mxu0 0.0
    %104 = vmatpush.msra.mxu0 0.0
    %105 = vmatpush.msra.mxu0 0.0
    %106 = vmatpush.msra.mxu0 %v70
    %107 = vmatpush.msra.mxu0 %v69
    %108 = vmatpush.msra.mxu0 %v68
    %109 = vmatpush.msra.mxu0 %v67
    %110 = vmatpush.msra.mxu0 %v66
    %111 = vmatpush.msra.mxu0 %v65
    %112 = vmatpush.msra.mxu0 %v64
    %113 = vmatpush.msra.mxu0 %v63
    %114 = vmatmul.f32.gmra.mxu0 %v96
    %v115 = vpop.f32.mrf.mxu0
    %v116 = vadd.f32 0.0, %v115
    %117 = vdwg.mxu0
    %v118 = vld [vmem:[#allocation8] sm:$0xff]
    %v119 = vld [vmem:[#allocation8 + $0x8] sm:$0xff]
    %v120 = vadd.f32 %v118, %v93
    %v121 = vadd.f32 %v119, %v116
    %122 = vst [vmem:[#allocation8] sm:$0xff] %v120
    %123 = vst [vmem:[#allocation8 + $0x8] sm:$0xff] %v121
    %v124 = vld [vmem:[#allocation2] sm:$0xff]
    %v125 = vld [vmem:[#allocation2 + $0x8] sm:$0xff]
    %v126 = vsel %vm71, %v53, 0.0
    %127 = vadd.xlane.f32.xlu0 %v126
    %v128 = vpop.xlane.xlu0 %127
    %v129 = vsel %vm71, %v54, 0.0
    %130 = vadd.xlane.f32.xlu0 %v129
    %v131 = vpop.xlane.xlu0 %130
    %v132 = vadd.f32 %v124, %v128
    %v133 = vadd.f32 %v125, %v131
    %vm134 = vcmask 7168
    %135 = vst.msk [vmem:[#allocation2] sm:$0xff] %vm134, %v132
    %136 = vst.msk [vmem:[#allocation2 + $0x8] sm:$0xff] %vm134, %v133
    // Predicated region
    $region22: #{tpu_custom_call.1} parent=1 // pred_check
      %p137 = pneg %p44
    $region23: #{tpu_custom_call.1} parent=1 // pred_check_branch
      %139 = sbr.rel (%p137) target = $region25
    $region24: #{tpu_custom_call.1} parent=1 // pred_region
      %v140 = vld [vmem:[#allocation2] sm:$0xff]
      %v141 = vld [vmem:[#allocation2 + $0x8] sm:$0xff]
      %v142 = vadd.f32 %v140, 6.4e-07
      %v143 = vadd.f32 %v141, 6.4e-07
      %v144 = vrcp.pop %v142
      %v145 = vmul.f32 %v142, %v144
      %v146 = vsub.f32 1.0, %v145
      %v147 = vmul.f32 %v144, %v146
      %v148 = vadd.f32 %v144, %v147
      %vm149 = vweird.f32 %v142
      %vm150 = vweird.f32 %v144
      %vm151 = vmor %vm149, %vm150
      %v152 = vsel %vm151, %v144, %v148
      %v153 = vand.u32 2147483647, %v142
      %vm154 = vcmp.eq.f32.partialorder %v153, 8.507059e+37
      %v155 = vand.u32 %v142, 2147483648
      %v156 = vor.u32 1.1754944e-38, %v155
      %v157 = vsel %vm154, %v156, %v152
      %v158 = vmul.f32 1.0, %v157
      %v159 = vrcp.pop %v143
      %v160 = vmul.f32 %v143, %v159
      %v161 = vsub.f32 1.0, %v160
      %v162 = vmul.f32 %v159, %v161
      %v163 = vadd.f32 %v159, %v162
      %vm164 = vweird.f32 %v143
      %vm165 = vweird.f32 %v159
      %vm166 = vmor %vm164, %vm165
      %v167 = vsel %vm166, %v159, %v163
      %v168 = vand.u32 2147483647, %v143
      %vm169 = vcmp.eq.f32.partialorder %v168, 8.507059e+37
      %v170 = vand.u32 %v143, 2147483648
      %v171 = vor.u32 1.1754944e-38, %v170
      %v172 = vsel %vm169, %v171, %v167
      %v173 = vmul.f32 1.0, %v172
      %v174 = vld [vmem:[#allocation8] sm:$0xff]
      %v175 = vld [vmem:[#allocation8 + $0x8] sm:$0xff]
      %177 = vset.pattern.permute.xlu0 0
      %178 = vperm.xlu0 %177, %v158
      %v179 = vpop.permute.xlu0 %178
      %182 = vset.pattern.permute.xlu0 0
      %183 = vperm.xlu0 %182, %v173
      %v184 = vpop.permute.xlu0 %183
      %v186 = vmul.f32 %v174, %v179
      %v187 = vmul.f32 %v175, %v184
      %188 = vst [vmem:[#allocation8] sm:$0xff] %v186
      %189 = vst [vmem:[#allocation8 + $0x8] sm:$0xff] %v187
    $region25: #{tpu_custom_call.1} parent=1 // pred_fallthru
      _
    // Predicated region
    $region26: #{tpu_custom_call.1} parent=1 // pred_check
      _
    $region27: #{tpu_custom_call.1} parent=1 // pred_check_branch
      %191 = sbr.rel (0) target = $region29
    $region28: #{tpu_custom_call.1} parent=1 // pred_region
      %193 = vsyncadd [#allocation5], 0
      %s194 = sshll.u32 [#allocation8], 4
      %s195 = int_to_ptr.vmem [resolvable:$true] %s194
      %s196 = sshll.u32 %s2, 4
      %s197 = int_to_ptr.hbm [resolvable:$true] %s196
      %202 = dma.vmem_to_hbm [thread:$0]  %s195, 256, %s197, [#allocation5], 128, 128, 8
    $region29: #{tpu_custom_call.1} parent=1 // pred_fallthru
      _
    // Predicated region
    $region30: #{tpu_custom_call.1} parent=1 // pred_check
      _
    $region31: #{tpu_custom_call.1} parent=1 // pred_check_branch
      %204 = sbr.rel (0) target = $region33
    $region32: #{tpu_custom_call.1} parent=1 // pred_region
      %206 = dma.done [#allocation5], 256
    $region33: #{tpu_custom_call.1} parent=1 // pred_fallthru
      _
    %207 = vsyncpa [#allocation4], 1
    %208 = vsyncpa [#allocation7], 1
    %209 = vsyncpa [#allocation5], 1

</llo_original>
